<compile_context>
chip_gen: v5e
topology: v5e:2x2
jax: 0.10.0
libtpu: 0.0.40
codegen_flags: <defaults>
</compile_context>

<pallas_src>
import functools

import jax
import jax.numpy as jnp
from jax import lax
from jax.experimental import pallas as pl
from jax.experimental.pallas import tpu as pltpu

EPS = 1e-5


def residual_block_kernel(x_ref, w1_ref, g1_ref, b1_ref, w2_ref, g2_ref, b2_ref,
                          o_ref, *, height, chans):
    """Single invocation; the whole (tiny) problem lives in VMEM.

    x_ref     : (NH, WC)       residual input; row r = n*H + h, lane l = w*C + c
    w*_ref    : (3*WC, WC)     K-stacked block-banded conv matrices
                               (kh = 0 / 1 / 2 blocks along K)
    g*, b*    : (1, WC)        BN gamma/beta pre-tiled per (w, c) lane
    o_ref     : (NH, WC)       output (lane-dense, unmasked stores)
    """
    NH, WC = x_ref.shape
    width = WC // chans
    inv_count = 1.0 / (NH * width)          # 1 / (N*H*W) for batch statistics

    # Boundary masks along H (zero padding), built once and reused by both
    # convs.  h == row % H; masks are full-shape so the selects need no
    # broadcast gymnastics.
    h_idx = lax.broadcasted_iota(jnp.int32, (NH, WC), 0) % height
    at_top = h_idx == 0
    at_bot = h_idx == height - 1

    def conv3x3(v, w_ref):
        # Neighbouring image rows via cyclic sublane rotation (XLU slot) +
        # boundary zeroing (VPU select); wrap-around rows are exactly the
        # rows the masks zero, so the cyclic roll is safe.
        row_above = jnp.where(at_top, 0.0, pltpu.roll(v, 1, axis=0))       # v[r-1]
        row_below = jnp.where(at_bot, 0.0, pltpu.roll(v, NH - 1, axis=0))  # v[r+1]
        # Lane-aligned K concatenation (three 128-wide blocks) -> one MXU
        # matmul against the K-stacked banded weights.
        v_cat = jnp.concatenate([row_above, v, row_below], axis=1)         # (NH, 3*WC)
        return jnp.dot(v_cat, w_ref[...], preferred_element_type=jnp.float32)

    def fold_channels(row):
        # (1, WC) per-(w, c) sums -> per-channel sums replicated across every
        # w group, via log2(W) cyclic lane rotations (XLU slot).  Result is
        # symmetric in the roll direction, so no convention risk.
        shift = WC // 2
        while shift >= chans:
            row = row + pltpu.roll(row, shift, 1)
            shift //= 2
        return row

    def batchnorm(y, g_row, b_row):
        # Training-mode BatchNorm2d: biased batch stats over (N, H, W) in a
        # single pass: var = E[y^2] - mean^2 (f32 accumulation; activations
        # here are small so cancellation is benign at 1e-3 tolerance).
        s1 = fold_channels(jnp.sum(y, axis=0, keepdims=True))
        s2 = fold_channels(jnp.sum(y * y, axis=0, keepdims=True))
        mean = s1 * inv_count
        var = s2 * inv_count - mean * mean
        scale = g_row * lax.rsqrt(var + EPS)
        offset = b_row - mean * scale
        return y * scale + offset

    x = x_ref[...]
    a1 = jnp.maximum(batchnorm(conv3x3(x, w1_ref), g1_ref[...], b1_ref[...]), 0.0)
    y2 = batchnorm(conv3x3(a1, w2_ref), g2_ref[...], b2_ref[...])
    o_ref[...] = jnp.maximum(x + y2, 0.0)


def _stacked_banded_weights(w_hwio, width):
    """(3, 3, Cin, Cout) HWIO weights -> (3*W*Cin, W*Cout) K-stacked matrices.

    Per kh tap: B[kh][wi*Cin + ci, wo*Cout + co] = w[kh, wi - wo + 1, ci, co]
    inside the band |wi - wo| <= 1, else 0 (zero padding along W), so that
    `rows @ B[kh]` applies the kw taps + channel mixing while keeping the
    activation lane-dense.  The three taps are stacked along K to match the
    in-kernel [row_above | row | row_below] lane concatenation.
    Note: (W*C)^2 per tap -- ideal at C=8 / W=16 (128x128); for real ResNet
    feature maps switch to an im2col / tiled formulation instead (these
    auxiliary matrices grow quadratically and would hit v7x's 64 MiB VMEM
    first).
    """
    _, _, cin, cout = w_hwio.shape
    wi = jnp.arange(width)[:, None]
    wo = jnp.arange(width)[None, :]
    kw = wi - wo + 1                                    # kw tap index if in band
    in_band = (kw >= 0) & (kw <= 2)
    blocks = w_hwio[:, jnp.clip(kw, 0, 2)]              # (3, W, W, Cin, Cout)
    blocks = jnp.where(in_band[None, :, :, None, None], blocks, 0.0)
    banded = blocks.transpose(0, 1, 3, 2, 4).reshape(3, width * cin, width * cout)
    return banded.reshape(3 * width * cin, width * cout)


def prepare_params(w1, g1, b1, w2, g2, b2, width):
    """One-time parameter prep, hoisted out of the per-call path.

    Returns (K-stacked banded conv1, gamma1 row, beta1 row,
             K-stacked banded conv2, gamma2 row, beta2 row).
    """
    c = w1.shape[2]
    assert c & (c - 1) == 0, "channel fold assumes power-of-two C"
    assert width & (width - 1) == 0, "channel fold assumes power-of-two W"

    def tile_row(p):                                    # (C,) -> (1, W*C)
        return jnp.tile(p.reshape(1, c).astype(jnp.float32), (1, width))

    return (
        _stacked_banded_weights(w1.astype(jnp.float32), width),
        tile_row(g1), tile_row(b1),
        _stacked_banded_weights(w2.astype(jnp.float32), width),
        tile_row(g2), tile_row(b2),
    )


@jax.jit
def residual_block(x_nhwc, params):
    N, H, W, C = x_nhwc.shape
    NH, WC = N * H, W * C
    f32 = jnp.float32
    wk1, g1r, b1r, wk2, g2r, b2r = params
    assert wk1.shape == (3 * WC, WC) and wk2.shape == (3 * WC, WC)

    x_rows = x_nhwc.astype(f32).reshape(NH, WC)         # lane-dense activations
    vmem = pl.BlockSpec(memory_space=pltpu.MemorySpace.VMEM)
    cost = pl.CostEstimate(
        flops=2 * (2 * NH * (3 * WC) * WC),             # two (NH,3WC)@(3WC,WC) matmuls
        transcendentals=2 * WC,                         # rsqrt per BN lane
        bytes_accessed=4 * (2 * NH * WC + 2 * 3 * WC * WC + 4 * WC),
    )
    out_rows = pl.pallas_call(
        functools.partial(residual_block_kernel, height=H, chans=C),
        out_shape=jax.ShapeDtypeStruct((NH, WC), f32),
        in_specs=[vmem] * 7,
        out_specs=vmem,
        cost_estimate=cost,
        # Everything (<0.5 MiB) fits in VMEM in one shot: no grid, no scratch,
        # single TensorCore (a v7x 2-TC split would need a cross-core BN-stat
        # exchange costing more than the kernel).  For real ResNet sizes: add
        # a "parallel" grid over N / H with a two-phase BN reduction and set
        # pltpu.CompilerParams(vmem_limit_bytes=...).
    )(x_rows, wk1, g1r, b1r, wk2, g2r, b2r)
    return out_rows.reshape(N, H, W, C)


def reference_forward(x, w1, g1, b1, w2, g2, b2):
    """Pure-JAX reference (NHWC), mirroring the PyTorch forward semantics."""
    def conv(x, w):
        return lax.conv_general_dilated(
            x, w, window_strides=(1, 1), padding=((1, 1), (1, 1)),
            dimension_numbers=("NHWC", "HWIO", "NHWC"))

    def bn(y, g, b):
        mean = jnp.mean(y, axis=(0, 1, 2), keepdims=True)
        var = jnp.mean((y - mean) ** 2, axis=(0, 1, 2), keepdims=True)
        return (y - mean) * lax.rsqrt(var + EPS) * g.reshape(1, 1, 1, -1) \
            + b.reshape(1, 1, 1, -1)

    y = jnp.maximum(bn(conv(x, w1), g1, b1), 0.0)
    y = bn(conv(y, w2), g2, b2)
    return jnp.maximum(x + y, 0.0)


if __name__ == "__main__":
    # ResidualBlock(in_feats=8, out_feats=8, stride=1)  -> downsample is None
    N, C, H, W = 2, 8, 16, 16
    key = jax.random.PRNGKey(0)
    kx, k1, k2 = jax.random.split(key, 3)

    # PyTorch-convention NCHW input, transposed to NHWC for the kernel.
    x_nchw = jax.random.normal(kx, (N, C, H, W), jnp.float32)
    x_nhwc = jnp.transpose(x_nchw, (0, 2, 3, 1))

    # Deterministic parameter init (shapes from the module's __init__).
    # Conv weights in HWIO; BN gamma=1 / beta=0 (PyTorch defaults).
    w1 = 0.1 * jax.random.normal(k1, (3, 3, C, C), jnp.float32)
    w2 = 0.1 * jax.random.normal(k2, (3, 3, C, C), jnp.float32)
    g1 = jnp.ones((C,), jnp.float32)
    b1 = jnp.zeros((C,), jnp.float32)
    g2 = jnp.ones((C,), jnp.float32)
    b2 = jnp.zeros((C,), jnp.float32)

    # Weight prep runs ONCE, outside the per-call jitted path.
    params = prepare_params(w1, g1, b1, w2, g2, b2, W)

    out = jax.block_until_ready(residual_block(x_nhwc, params))
    ref = reference_forward(x_nhwc, w1, g1, b1, w2, g2, b2)

    assert out.shape == (N, H, W, C)
    assert jnp.allclose(out, ref, atol=1e-3, rtol=1e-3), (
        float(jnp.max(jnp.abs(out - ref))))

    print("KERNEL_OK")
</pallas_src>

<mosaic_0001>
module attributes {stable_mosaic.version = 11 : i64} {
  func.func @residual_block_kernel(%arg0: memref<32x128xf32, #tpu.memory_space<vmem>>, %arg1: memref<384x128xf32, #tpu.memory_space<vmem>>, %arg2: memref<1x128xf32, #tpu.memory_space<vmem>>, %arg3: memref<1x128xf32, #tpu.memory_space<vmem>>, %arg4: memref<384x128xf32, #tpu.memory_space<vmem>>, %arg5: memref<1x128xf32, #tpu.memory_space<vmem>>, %arg6: memref<1x128xf32, #tpu.memory_space<vmem>>, %arg7: memref<32x128xf32, #tpu.memory_space<vmem>>) attributes {dimension_semantics = [], scalar_prefetch = 0 : i64, scratch_operands = 0 : i64, tpu.core_type = #tpu.core_type<tc>} {
    %0 = tpu.iota {dimensions = array<i32: 0>} : vector<32x128xi32>
    %c16_i32 = arith.constant 16 : i32
    %c0_i32 = arith.constant 0 : i32
    %1 = arith.cmpi eq, %c16_i32, %c0_i32 : i32
    %c1_i32 = arith.constant 1 : i32
    %2 = arith.select %1, %c1_i32, %c16_i32 : i32
    %3 = vector.broadcast %2 : i32 to vector<32x128xi32>
    %4 = arith.remsi %0, %3 : vector<32x128xi32>
    %c0_i32_0 = arith.constant 0 : i32
    %5 = vector.broadcast %c0_i32_0 : i32 to vector<32x128xi32>
    %6 = arith.cmpi ne, %4, %5 : vector<32x128xi32>
    %c0_i32_1 = arith.constant 0 : i32
    %7 = vector.broadcast %c0_i32_1 : i32 to vector<32x128xi32>
    %8 = arith.cmpi slt, %4, %7 : vector<32x128xi32>
    %c0_i32_2 = arith.constant 0 : i32
    %9 = arith.cmpi slt, %2, %c0_i32_2 : i32
    %10 = vector.broadcast %9 : i1 to vector<32x128xi1>
    %11 = vector.broadcast %10 : vector<32x128xi1> to vector<32x128xi1>
    %12 = arith.xori %8, %11 : vector<32x128xi1>
    %13 = arith.andi %12, %6 : vector<32x128xi1>
    %14 = vector.broadcast %2 : i32 to vector<32x128xi32>
    %15 = arith.addi %4, %14 : vector<32x128xi32>
    %16 = arith.select %13, %15, %4 : vector<32x128xi1>, vector<32x128xi32>
    %c0_i32_3 = arith.constant 0 : i32
    %17 = vector.broadcast %c0_i32_3 : i32 to vector<32x128xi32>
    %18 = arith.cmpi eq, %16, %17 : vector<32x128xi32>
    %c15_i32 = arith.constant 15 : i32
    %19 = vector.broadcast %c15_i32 : i32 to vector<32x128xi32>
    %20 = arith.cmpi eq, %16, %19 : vector<32x128xi32>
    %c0 = arith.constant 0 : index
    %c0_4 = arith.constant 0 : index
    %21 = vector.load %arg0[%c0, %c0_4] : memref<32x128xf32, #tpu.memory_space<vmem>>, vector<32x128xf32>
    %c1_i32_5 = arith.constant 1 : i32
    %22 = tpu.dynamic_rotate %21 by %c1_i32_5 dim 0 : vector<32x128xf32>, i32 -> vector<32x128xf32>
    %cst = arith.constant 0.000000e+00 : f32
    %23 = vector.broadcast %cst : f32 to vector<32x128xf32>
    %24 = arith.select %18, %23, %22 : vector<32x128xi1>, vector<32x128xf32>
    %c31_i32 = arith.constant 31 : i32
    %25 = tpu.dynamic_rotate %21 by %c31_i32 dim 0 : vector<32x128xf32>, i32 -> vector<32x128xf32>
    %cst_6 = arith.constant 0.000000e+00 : f32
    %26 = vector.broadcast %cst_6 : f32 to vector<32x128xf32>
    %27 = arith.select %20, %26, %25 : vector<32x128xi1>, vector<32x128xf32>
    %28 = tpu.concatenate %24, %21, %27 in 1 : vector<32x128xf32>, vector<32x128xf32>, vector<32x128xf32> -> vector<32x384xf32>
    %c0_7 = arith.constant 0 : index
    %c0_8 = arith.constant 0 : index
    %29 = vector.load %arg1[%c0_7, %c0_8] : memref<384x128xf32, #tpu.memory_space<vmem>>, vector<384x128xf32>
    %cst_9 = arith.constant dense<0.000000e+00> : vector<32x128xf32>
    %30 = tpu.matmul %28, %29, %cst_9 {dimension_numbers = #tpu.dot_dimension_numbers<[1], [0], [0], [1], [0, 0, 1, 1], [], []>} : vector<32x384xf32>, vector<384x128xf32>, vector<32x128xf32> -> vector<32x128xf32>
    %c0_10 = arith.constant 0 : index
    %c0_11 = arith.constant 0 : index
    %31 = vector.load %arg2[%c0_10, %c0_11] : memref<1x128xf32, #tpu.memory_space<vmem>>, vector<1x128xf32>
    %c0_12 = arith.constant 0 : index
    %c0_13 = arith.constant 0 : index
    %32 = vector.load %arg3[%c0_12, %c0_13] : memref<1x128xf32, #tpu.memory_space<vmem>>, vector<1x128xf32>
    %cst_14 = arith.constant dense<0.000000e+00> : vector<128xf32>
    %33 = vector.multi_reduction <add>, %30, %cst_14 [0] : vector<32x128xf32> to vector<128xf32>
    %34 = vector.shape_cast %33 : vector<128xf32> to vector<1x128xf32>
    %c64_i32 = arith.constant 64 : i32
    %35 = tpu.dynamic_rotate %34 by %c64_i32 dim 1 : vector<1x128xf32>, i32 -> vector<1x128xf32>
    %36 = arith.addf %34, %35 : vector<1x128xf32>
    %c32_i32 = arith.constant 32 : i32
    %37 = tpu.dynamic_rotate %36 by %c32_i32 dim 1 : vector<1x128xf32>, i32 -> vector<1x128xf32>
    %38 = arith.addf %36, %37 : vector<1x128xf32>
    %c16_i32_15 = arith.constant 16 : i32
    %39 = tpu.dynamic_rotate %38 by %c16_i32_15 dim 1 : vector<1x128xf32>, i32 -> vector<1x128xf32>
    %40 = arith.addf %38, %39 : vector<1x128xf32>
    %c8_i32 = arith.constant 8 : i32
    %41 = tpu.dynamic_rotate %40 by %c8_i32 dim 1 : vector<1x128xf32>, i32 -> vector<1x128xf32>
    %42 = arith.addf %40, %41 : vector<1x128xf32>
    %43 = arith.mulf %30, %30 : vector<32x128xf32>
    %cst_16 = arith.constant dense<0.000000e+00> : vector<128xf32>
    %44 = vector.multi_reduction <add>, %43, %cst_16 [0] : vector<32x128xf32> to vector<128xf32>
    %45 = vector.shape_cast %44 : vector<128xf32> to vector<1x128xf32>
    %c64_i32_17 = arith.constant 64 : i32
    %46 = tpu.dynamic_rotate %45 by %c64_i32_17 dim 1 : vector<1x128xf32>, i32 -> vector<1x128xf32>
    %47 = arith.addf %45, %46 : vector<1x128xf32>
    %c32_i32_18 = arith.constant 32 : i32
    %48 = tpu.dynamic_rotate %47 by %c32_i32_18 dim 1 : vector<1x128xf32>, i32 -> vector<1x128xf32>
    %49 = arith.addf %47, %48 : vector<1x128xf32>
    %c16_i32_19 = arith.constant 16 : i32
    %50 = tpu.dynamic_rotate %49 by %c16_i32_19 dim 1 : vector<1x128xf32>, i32 -> vector<1x128xf32>
    %51 = arith.addf %49, %50 : vector<1x128xf32>
    %c8_i32_20 = arith.constant 8 : i32
    %52 = tpu.dynamic_rotate %51 by %c8_i32_20 dim 1 : vector<1x128xf32>, i32 -> vector<1x128xf32>
    %53 = arith.addf %51, %52 : vector<1x128xf32>
    %cst_21 = arith.constant 0.001953125 : f32
    %54 = vector.broadcast %cst_21 : f32 to vector<1x128xf32>
    %55 = arith.mulf %42, %54 : vector<1x128xf32>
    %cst_22 = arith.constant 0.001953125 : f32
    %56 = vector.broadcast %cst_22 : f32 to vector<1x128xf32>
    %57 = arith.mulf %53, %56 : vector<1x128xf32>
    %58 = arith.mulf %55, %55 : vector<1x128xf32>
    %59 = arith.subf %57, %58 : vector<1x128xf32>
    %cst_23 = arith.constant 9.99999974E-6 : f32
    %60 = vector.broadcast %cst_23 : f32 to vector<1x128xf32>
    %61 = arith.addf %59, %60 : vector<1x128xf32>
    %62 = math.rsqrt %61 : vector<1x128xf32>
    %63 = arith.mulf %31, %62 : vector<1x128xf32>
    %64 = arith.mulf %55, %63 : vector<1x128xf32>
    %65 = arith.subf %32, %64 : vector<1x128xf32>
    %66 = vector.broadcast %63 : vector<1x128xf32> to vector<32x128xf32>
    %67 = arith.mulf %30, %66 : vector<32x128xf32>
    %68 = vector.broadcast %65 : vector<1x128xf32> to vector<32x128xf32>
    %69 = arith.addf %67, %68 : vector<32x128xf32>
    %cst_24 = arith.constant 0.000000e+00 : f32
    %70 = vector.broadcast %cst_24 : f32 to vector<32x128xf32>
    %71 = arith.maximumf %69, %70 : vector<32x128xf32>
    %c1_i32_25 = arith.constant 1 : i32
    %72 = tpu.dynamic_rotate %71 by %c1_i32_25 dim 0 : vector<32x128xf32>, i32 -> vector<32x128xf32>
    %cst_26 = arith.constant 0.000000e+00 : f32
    %73 = vector.broadcast %cst_26 : f32 to vector<32x128xf32>
    %74 = arith.select %18, %73, %72 : vector<32x128xi1>, vector<32x128xf32>
    %c31_i32_27 = arith.constant 31 : i32
    %75 = tpu.dynamic_rotate %71 by %c31_i32_27 dim 0 : vector<32x128xf32>, i32 -> vector<32x128xf32>
    %cst_28 = arith.constant 0.000000e+00 : f32
    %76 = vector.broadcast %cst_28 : f32 to vector<32x128xf32>
    %77 = arith.select %20, %76, %75 : vector<32x128xi1>, vector<32x128xf32>
    %78 = tpu.concatenate %74, %71, %77 in 1 : vector<32x128xf32>, vector<32x128xf32>, vector<32x128xf32> -> vector<32x384xf32>
    %c0_29 = arith.constant 0 : index
    %c0_30 = arith.constant 0 : index
    %79 = vector.load %arg4[%c0_29, %c0_30] : memref<384x128xf32, #tpu.memory_space<vmem>>, vector<384x128xf32>
    %cst_31 = arith.constant dense<0.000000e+00> : vector<32x128xf32>
    %80 = tpu.matmul %78, %79, %cst_31 {dimension_numbers = #tpu.dot_dimension_numbers<[1], [0], [0], [1], [0, 0, 1, 1], [], []>} : vector<32x384xf32>, vector<384x128xf32>, vector<32x128xf32> -> vector<32x128xf32>
    %c0_32 = arith.constant 0 : index
    %c0_33 = arith.constant 0 : index
    %81 = vector.load %arg5[%c0_32, %c0_33] : memref<1x128xf32, #tpu.memory_space<vmem>>, vector<1x128xf32>
    %c0_34 = arith.constant 0 : index
    %c0_35 = arith.constant 0 : index
    %82 = vector.load %arg6[%c0_34, %c0_35] : memref<1x128xf32, #tpu.memory_space<vmem>>, vector<1x128xf32>
    %cst_36 = arith.constant dense<0.000000e+00> : vector<128xf32>
    %83 = vector.multi_reduction <add>, %80, %cst_36 [0] : vector<32x128xf32> to vector<128xf32>
    %84 = vector.shape_cast %83 : vector<128xf32> to vector<1x128xf32>
    %c64_i32_37 = arith.constant 64 : i32
    %85 = tpu.dynamic_rotate %84 by %c64_i32_37 dim 1 : vector<1x128xf32>, i32 -> vector<1x128xf32>
    %86 = arith.addf %84, %85 : vector<1x128xf32>
    %c32_i32_38 = arith.constant 32 : i32
    %87 = tpu.dynamic_rotate %86 by %c32_i32_38 dim 1 : vector<1x128xf32>, i32 -> vector<1x128xf32>
    %88 = arith.addf %86, %87 : vector<1x128xf32>
    %c16_i32_39 = arith.constant 16 : i32
    %89 = tpu.dynamic_rotate %88 by %c16_i32_39 dim 1 : vector<1x128xf32>, i32 -> vector<1x128xf32>
    %90 = arith.addf %88, %89 : vector<1x128xf32>
    %c8_i32_40 = arith.constant 8 : i32
    %91 = tpu.dynamic_rotate %90 by %c8_i32_40 dim 1 : vector<1x128xf32>, i32 -> vector<1x128xf32>
    %92 = arith.addf %90, %91 : vector<1x128xf32>
    %93 = arith.mulf %80, %80 : vector<32x128xf32>
    %cst_41 = arith.constant dense<0.000000e+00> : vector<128xf32>
    %94 = vector.multi_reduction <add>, %93, %cst_41 [0] : vector<32x128xf32> to vector<128xf32>
    %95 = vector.shape_cast %94 : vector<128xf32> to vector<1x128xf32>
    %c64_i32_42 = arith.constant 64 : i32
    %96 = tpu.dynamic_rotate %95 by %c64_i32_42 dim 1 : vector<1x128xf32>, i32 -> vector<1x128xf32>
    %97 = arith.addf %95, %96 : vector<1x128xf32>
    %c32_i32_43 = arith.constant 32 : i32
    %98 = tpu.dynamic_rotate %97 by %c32_i32_43 dim 1 : vector<1x128xf32>, i32 -> vector<1x128xf32>
    %99 = arith.addf %97, %98 : vector<1x128xf32>
    %c16_i32_44 = arith.constant 16 : i32
    %100 = tpu.dynamic_rotate %99 by %c16_i32_44 dim 1 : vector<1x128xf32>, i32 -> vector<1x128xf32>
    %101 = arith.addf %99, %100 : vector<1x128xf32>
    %c8_i32_45 = arith.constant 8 : i32
    %102 = tpu.dynamic_rotate %101 by %c8_i32_45 dim 1 : vector<1x128xf32>, i32 -> vector<1x128xf32>
    %103 = arith.addf %101, %102 : vector<1x128xf32>
    %cst_46 = arith.constant 0.001953125 : f32
    %104 = vector.broadcast %cst_46 : f32 to vector<1x128xf32>
    %105 = arith.mulf %92, %104 : vector<1x128xf32>
    %cst_47 = arith.constant 0.001953125 : f32
    %106 = vector.broadcast %cst_47 : f32 to vector<1x128xf32>
    %107 = arith.mulf %103, %106 : vector<1x128xf32>
    %108 = arith.mulf %105, %105 : vector<1x128xf32>
    %109 = arith.subf %107, %108 : vector<1x128xf32>
    %cst_48 = arith.constant 9.99999974E-6 : f32
    %110 = vector.broadcast %cst_48 : f32 to vector<1x128xf32>
    %111 = arith.addf %109, %110 : vector<1x128xf32>
    %112 = math.rsqrt %111 : vector<1x128xf32>
    %113 = arith.mulf %81, %112 : vector<1x128xf32>
    %114 = arith.mulf %105, %113 : vector<1x128xf32>
    %115 = arith.subf %82, %114 : vector<1x128xf32>
    %116 = vector.broadcast %113 : vector<1x128xf32> to vector<32x128xf32>
    %117 = arith.mulf %80, %116 : vector<32x128xf32>
    %118 = vector.broadcast %115 : vector<1x128xf32> to vector<32x128xf32>
    %119 = arith.addf %117, %118 : vector<32x128xf32>
    %120 = arith.addf %21, %119 : vector<32x128xf32>
    %cst_49 = arith.constant 0.000000e+00 : f32
    %121 = vector.broadcast %cst_49 : f32 to vector<32x128xf32>
    %122 = arith.maximumf %120, %121 : vector<32x128xf32>
    %c0_50 = arith.constant 0 : index
    %c0_51 = arith.constant 0 : index
    %123 = vector.load %arg7[%c0_50, %c0_51] : memref<32x128xf32, #tpu.memory_space<vmem>>, vector<32x128xf32>
    tpu.vector_store %arg7[%c0_50, %c0_51], %122 {strides = array<i32>} : memref<32x128xf32, #tpu.memory_space<vmem>>, vector<32x128xf32>,
    return
  }
}

</mosaic_0001>

<llo_original>
// kernel: residual_block.1
$region0: #{residual_block.1}
  #allocation0 [shape = 'u32[]', space=smem, size = 0x4, offset = 0x4, fixed_abs, tag = 'smem constant byte address 0x4 - core index']
  #allocation1 [shape = 'u32[72,128]{1,0:T(1,128)}', space=vmem, size = 0x9000, scoped, tag = 'internal scratch']
  %s0 = inlined_call_operand.vmem [shape: f32[32,128], index: 0, kind: input, shape index: {}]
  %s1 = inlined_call_operand.vmem [shape: f32[384,128], index: 1, kind: input, shape index: {}]
  %s2 = inlined_call_operand.vmem [shape: f32[1,128], index: 2, kind: input, shape index: {}]
  %s3 = inlined_call_operand.vmem [shape: f32[1,128], index: 3, kind: input, shape index: {}]
  %s4 = inlined_call_operand.vmem [shape: f32[384,128], index: 4, kind: input, shape index: {}]
  %s5 = inlined_call_operand.vmem [shape: f32[1,128], index: 5, kind: input, shape index: {}]
  %s6 = inlined_call_operand.vmem [shape: f32[1,128], index: 6, kind: input, shape index: {}]
  %s7 = inlined_call_operand.vmem [shape: f32[32,128], index: 7, kind: output, shape index: {}]
  %s8 = sld [smem:[#allocation0]]
  $region38: #{residual_block.1} parent=0
    _
  %s10 = ssub.s32 1, %s8
  %s11 = scalar_select 0, %s10, %s8
  // Predicated region
  $region2: #{residual_block.1} parent=0 // pred_check
    _
  $region3: #{residual_block.1} parent=0 // pred_check_branch
    %13 = sbr.rel (0) target = $region5
  $region4: #{residual_block.1} parent=0 // pred_region
    _
  $region5: #{residual_block.1} parent=0 // pred_fallthru
    _
  // Predicated region
  $region6: #{residual_block.1} parent=0 // pred_check
    _
  $region7: #{residual_block.1} parent=0 // pred_check_branch
    %15 = sbr.rel (0) target = $region9
  $region8: #{residual_block.1} parent=0 // pred_region
    _
  $region9: #{residual_block.1} parent=0 // pred_fallthru
    _
  // Predicated region
  $region10: #{residual_block.1} parent=0 // pred_check
    _
  $region11: #{residual_block.1} parent=0 // pred_check_branch
    %17 = sbr.rel (0) target = $region13
  $region12: #{residual_block.1} parent=0 // pred_region
    _
  $region13: #{residual_block.1} parent=0 // pred_fallthru
    _
  // Predicated region
  $region14: #{residual_block.1} parent=0 // pred_check
    _
  $region15: #{residual_block.1} parent=0 // pred_check_branch
    %19 = sbr.rel (0) target = $region17
  $region16: #{residual_block.1} parent=0 // pred_region
    _
  $region17: #{residual_block.1} parent=0 // pred_fallthru
    _
  // Predicated region
  $region18: #{residual_block.1} parent=0 // pred_check
    _
  $region19: #{residual_block.1} parent=0 // pred_check_branch
    %21 = sbr.rel (0) target = $region21
  $region20: #{residual_block.1} parent=0 // pred_region
    _
  $region21: #{residual_block.1} parent=0 // pred_fallthru
    _
  // Predicated region
  $region22: #{residual_block.1} parent=0 // pred_check
    _
  $region23: #{residual_block.1} parent=0 // pred_check_branch
    %23 = sbr.rel (0) target = $region25
  $region24: #{residual_block.1} parent=0 // pred_region
    _
  $region25: #{residual_block.1} parent=0 // pred_fallthru
    _
  // Predicated region
  $region26: #{residual_block.1} parent=0 // pred_check
    _
  $region27: #{residual_block.1} parent=0 // pred_check_branch
    %25 = sbr.rel (0) target = $region29
  $region28: #{residual_block.1} parent=0 // pred_region
    _
  $region29: #{residual_block.1} parent=0 // pred_fallthru
    _
  %v26 = vlaneseq
  %v27 = vshrl.u32 %v26, 7
  %v28 = vadd.s32 %v27, 8
  %v29 = vadd.s32 %v27, 16
  %v30 = vadd.s32 %v27, 24
  %vm31 = vcmp.lt.s32.totalorder %v27, 0
  %v32 = vsub.s32 0, %v27
  %v33 = vsel %vm31, %v32, %v27
  %v34 = vshrl.u32 %v33, 4
  %v35 = vand.u32 %v33, 15
  %v36 = vsub.s32 0, %v35
  %v37 = vsel %vm31, %v36, %v35
  %vm38 = vcmp.lt.s32.totalorder %v28, 0
  %v39 = vsub.s32 0, %v28
  %v40 = vsel %vm38, %v39, %v28
  %v41 = vshrl.u32 %v40, 4
  %v42 = vand.u32 %v40, 15
  %v43 = vsub.s32 0, %v42
  %v44 = vsel %vm38, %v43, %v42
  %vm45 = vcmp.lt.s32.totalorder %v29, 0
  %v46 = vsub.s32 0, %v29
  %v47 = vsel %vm45, %v46, %v29
  %v48 = vshrl.u32 %v47, 4
  %v49 = vand.u32 %v47, 15
  %v50 = vsub.s32 0, %v49
  %v51 = vsel %vm45, %v50, %v49
  %vm52 = vcmp.lt.s32.totalorder %v30, 0
  %v53 = vsub.s32 0, %v30
  %v54 = vsel %vm52, %v53, %v30
  %v55 = vshrl.u32 %v54, 4
  %v56 = vand.u32 %v54, 15
  %v57 = vsub.s32 0, %v56
  %v58 = vsel %vm52, %v57, %v56
  %vm59 = vcmp.ne.s32.totalorder %v37, 0
  %vm60 = vcmp.ne.s32.totalorder %v44, 0
  %vm61 = vcmp.ne.s32.totalorder %v51, 0
  %vm62 = vcmp.ne.s32.totalorder %v58, 0
  %vm63 = vcmp.lt.s32.totalorder %v37, 0
  %vm64 = vcmp.lt.s32.totalorder %v44, 0
  %vm65 = vcmp.lt.s32.totalorder %v51, 0
  %vm66 = vcmp.lt.s32.totalorder %v58, 0
  %vm67 = vmand %vm63, %vm59
  %vm68 = vmand %vm64, %vm60
  %vm69 = vmand %vm65, %vm61
  %vm70 = vmand %vm66, %vm62
  %v71 = vadd.s32 %v37, 16
  %v72 = vadd.s32 %v44, 16
  %v73 = vadd.s32 %v51, 16
  %v74 = vadd.s32 %v58, 16
  %v75 = vsel %vm67, %v71, %v37
  %v76 = vsel %vm68, %v72, %v44
  %v77 = vsel %vm69, %v73, %v51
  %v78 = vsel %vm70, %v74, %v58
  %vm79 = vcmp.eq.s32.totalorder %v75, 0
  %vm80 = vcmp.eq.s32.totalorder %v76, 0
  %vm81 = vcmp.eq.s32.totalorder %v77, 0
  %vm82 = vcmp.eq.s32.totalorder %v78, 0
  %vm83 = vcmp.eq.s32.totalorder %v75, 15
  %vm84 = vcmp.eq.s32.totalorder %v76, 15
  %vm85 = vcmp.eq.s32.totalorder %v77, 15
  %vm86 = vcmp.eq.s32.totalorder %v78, 15
  %v87 = vld [vmem:[%s0] sm:$0xff]
  %v88 = vld [vmem:[%s0 + $0x8] sm:$0xff]
  %v89 = vld [vmem:[%s0 + $0x10] sm:$0xff]
  %v90 = vld [vmem:[%s0 + $0x18] sm:$0xff]
  %v91 = vrot.slane %v87, 7
  %v92 = vrot.slane %v88, 7
  %v93 = vrot.slane %v89, 7
  %v94 = vrot.slane %v90, 7
  %vm95 = vcmp.lt.s32.totalorder %v27, 1
  %v96 = vsel %vm95, %v93, %v94
  %v97 = vsel %vm95, %v92, %v93
  %v98 = vsel %vm95, %v91, %v92
  %v99 = vsel %vm95, %v94, %v91
  %v100 = vsel %vm79, 0.0, %v99
  %v101 = vsel %vm80, 0.0, %v98
  %v102 = vsel %vm81, 0.0, %v97
  %v103 = vsel %vm82, 0.0, %v96
  %v104 = vrot.slane %v87, 1
  %v105 = vrot.slane %v88, 1
  %v106 = vrot.slane %v89, 1
  %v107 = vrot.slane %v90, 1
  %vm108 = vcmp.lt.s32.totalorder %v27, 7
  %v109 = vsel %vm108, %v106, %v107
  %v110 = vsel %vm108, %v105, %v106
  %v111 = vsel %vm108, %v104, %v105
  %v112 = vsel %vm108, %v107, %v104
  %v113 = vsel %vm83, 0.0, %v111
  %v114 = vsel %vm84, 0.0, %v110
  %v115 = vsel %vm85, 0.0, %v109
  %v116 = vsel %vm86, 0.0, %v112
  %v117 = vld [vmem:[%s1] sm:$0xff]
  %v118 = vld [vmem:[%s1 + $0x8] sm:$0xff]
  %v119 = vld [vmem:[%s1 + $0x10] sm:$0xff]
  %v120 = vld [vmem:[%s1 + $0x18] sm:$0xff]
  %v121 = vld [vmem:[%s1 + $0x20] sm:$0xff]
  %v122 = vld [vmem:[%s1 + $0x28] sm:$0xff]
  %v123 = vld [vmem:[%s1 + $0x30] sm:$0xff]
  %v124 = vld [vmem:[%s1 + $0x38] sm:$0xff]
  %v125 = vld [vmem:[%s1 + $0x40] sm:$0xff]
  %v126 = vld [vmem:[%s1 + $0x48] sm:$0xff]
  %v127 = vld [vmem:[%s1 + $0x50] sm:$0xff]
  %v128 = vld [vmem:[%s1 + $0x58] sm:$0xff]
  %v129 = vld [vmem:[%s1 + $0x60] sm:$0xff]
  %v130 = vld [vmem:[%s1 + $0x68] sm:$0xff]
  %v131 = vld [vmem:[%s1 + $0x70] sm:$0xff]
  %v132 = vld [vmem:[%s1 + $0x78] sm:$0xff]
  %v133 = vld [vmem:[%s1 + $0x80] sm:$0xff]
  %v134 = vld [vmem:[%s1 + $0x88] sm:$0xff]
  %v135 = vld [vmem:[%s1 + $0x90] sm:$0xff]
  %v136 = vld [vmem:[%s1 + $0x98] sm:$0xff]
  %v137 = vld [vmem:[%s1 + $0xa0] sm:$0xff]
  %v138 = vld [vmem:[%s1 + $0xa8] sm:$0xff]
  %v139 = vld [vmem:[%s1 + $0xb0] sm:$0xff]
  %v140 = vld [vmem:[%s1 + $0xb8] sm:$0xff]
  %v141 = vld [vmem:[%s1 + $0xc0] sm:$0xff]
  %v142 = vld [vmem:[%s1 + $0xc8] sm:$0xff]
  %v143 = vld [vmem:[%s1 + $0xd0] sm:$0xff]
  %v144 = vld [vmem:[%s1 + $0xd8] sm:$0xff]
  %v145 = vld [vmem:[%s1 + $0xe0] sm:$0xff]
  %v146 = vld [vmem:[%s1 + $0xe8] sm:$0xff]
  %v147 = vld [vmem:[%s1 + $0xf0] sm:$0xff]
  %v148 = vld [vmem:[%s1 + $0xf8] sm:$0xff]
  %v149 = vld [vmem:[%s1 + $0x100] sm:$0xff]
  %v150 = vld [vmem:[%s1 + $0x108] sm:$0xff]
  %v151 = vld [vmem:[%s1 + $0x110] sm:$0xff]
  %v152 = vld [vmem:[%s1 + $0x118] sm:$0xff]
  %v153 = vld [vmem:[%s1 + $0x120] sm:$0xff]
  %v154 = vld [vmem:[%s1 + $0x128] sm:$0xff]
  %v155 = vld [vmem:[%s1 + $0x130] sm:$0xff]
  %v156 = vld [vmem:[%s1 + $0x138] sm:$0xff]
  %v157 = vld [vmem:[%s1 + $0x140] sm:$0xff]
  %v158 = vld [vmem:[%s1 + $0x148] sm:$0xff]
  %v159 = vld [vmem:[%s1 + $0x150] sm:$0xff]
  %v160 = vld [vmem:[%s1 + $0x158] sm:$0xff]
  %v161 = vld [vmem:[%s1 + $0x160] sm:$0xff]
  %v162 = vld [vmem:[%s1 + $0x168] sm:$0xff]
  %v163 = vld [vmem:[%s1 + $0x170] sm:$0xff]
  %v164 = vld [vmem:[%s1 + $0x178] sm:$0xff]
  %165 = vmatpush.msra.mxu0 %v132
  %166 = vmatpush.msra.mxu0 %v131
  %167 = vmatpush.msra.mxu0 %v130
  %168 = vmatpush.msra.mxu0 %v129
  %169 = vmatpush.msra.mxu0 %v128
  %170 = vmatpush.msra.mxu0 %v127
  %171 = vmatpush.msra.mxu0 %v126
  %172 = vmatpush.msra.mxu0 %v125
  %173 = vmatpush.msra.mxu0 %v124
  %174 = vmatpush.msra.mxu0 %v123
  %175 = vmatpush.msra.mxu0 %v122
  %176 = vmatpush.msra.mxu0 %v121
  %177 = vmatpush.msra.mxu0 %v120
  %178 = vmatpush.msra.mxu0 %v119
  %179 = vmatpush.msra.mxu0 %v118
  %180 = vmatpush.msra.mxu0 %v117
  %181 = vmatmul.f32.gmra.mxu0 %v100
  %v182 = vpop.f32.mrf.mxu0
  %v183 = vadd.f32 0.0, %v182
  %184 = vmatmul.f32.gmra.mxu0 %v101
  %v185 = vpop.f32.mrf.mxu0
  %v186 = vadd.f32 0.0, %v185
  %187 = vmatmul.f32.gmra.mxu0 %v102
  %v188 = vpop.f32.mrf.mxu0
  %v189 = vadd.f32 0.0, %v188
  %190 = vmatmul.f32.gmra.mxu0 %v103
  %v191 = vpop.f32.mrf.mxu0
  %v192 = vadd.f32 0.0, %v191
  %193 = vdwg.mxu0
  %194 = vmatpush.msra.mxu0 %v148
  %195 = vmatpush.msra.mxu0 %v147
  %196 = vmatpush.msra.mxu0 %v146
  %197 = vmatpush.msra.mxu0 %v145
  %198 = vmatpush.msra.mxu0 %v144
  %199 = vmatpush.msra.mxu0 %v143
  %200 = vmatpush.msra.mxu0 %v142
  %201 = vmatpush.msra.mxu0 %v141
  %202 = vmatpush.msra.mxu0 %v140
  %203 = vmatpush.msra.mxu0 %v139
  %204 = vmatpush.msra.mxu0 %v138
  %205 = vmatpush.msra.mxu0 %v137
  %206 = vmatpush.msra.mxu0 %v136
  %207 = vmatpush.msra.mxu0 %v135
  %208 = vmatpush.msra.mxu0 %v134
  %209 = vmatpush.msra.mxu0 %v133
  %210 = vmatmul.f32.gmra.mxu0 %v87
  %v211 = vpop.f32.mrf.mxu0
  %v212 = vadd.f32 %v183, %v211
  %213 = vmatmul.f32.gmra.mxu0 %v88
  %v214 = vpop.f32.mrf.mxu0
  %v215 = vadd.f32 %v186, %v214
  %216 = vmatmul.f32.gmra.mxu0 %v89
  %v217 = vpop.f32.mrf.mxu0
  %v218 = vadd.f32 %v189, %v217
  %219 = vmatmul.f32.gmra.mxu0 %v90
  %v220 = vpop.f32.mrf.mxu0
  %v221 = vadd.f32 %v192, %v220
  %222 = vdwg.mxu0
  %223 = vmatpush.msra.mxu0 %v164
  %224 = vmatpush.msra.mxu0 %v163
  %225 = vmatpush.msra.mxu0 %v162
  %226 = vmatpush.msra.mxu0 %v161
  %227 = vmatpush.msra.mxu0 %v160
  %228 = vmatpush.msra.mxu0 %v159
  %229 = vmatpush.msra.mxu0 %v158
  %230 = vmatpush.msra.mxu0 %v157
  %231 = vmatpush.msra.mxu0 %v156
  %232 = vmatpush.msra.mxu0 %v155
  %233 = vmatpush.msra.mxu0 %v154
  %234 = vmatpush.msra.mxu0 %v153
  %235 = vmatpush.msra.mxu0 %v152
  %236 = vmatpush.msra.mxu0 %v151
  %237 = vmatpush.msra.mxu0 %v150
  %238 = vmatpush.msra.mxu0 %v149
  %239 = vmatmul.f32.gmra.mxu0 %v113
  %v240 = vpop.f32.mrf.mxu0
  %v241 = vadd.f32 %v212, %v240
  %242 = vmatmul.f32.gmra.mxu0 %v114
  %v243 = vpop.f32.mrf.mxu0
  %v244 = vadd.f32 %v215, %v243
  %245 = vmatmul.f32.gmra.mxu0 %v115
  %v246 = vpop.f32.mrf.mxu0
  %v247 = vadd.f32 %v218, %v246
  %248 = vmatmul.f32.gmra.mxu0 %v116
  %v249 = vpop.f32.mrf.mxu0
  %v250 = vadd.f32 %v221, %v249
  %251 = vdwg.mxu0
  %v252 = vld [vmem:[%s2] sm:$0x1]
  %v253 = vld [vmem:[%s3] sm:$0x1]
  %v254 = vadd.f32 %v241, %v244
  %v255 = vadd.f32 %v254, %v247
  %v256 = vadd.f32 %v255, %v250
  %v257 = vrot.slane %v256, 4
  %v258 = vadd.f32 %v256, %v257
  %v259 = vrot.slane %v258, 2
  %v260 = vadd.f32 %v258, %v259
  %v261 = vrot.slane %v260, 1
  %v262 = vadd.f32 %v260, %v261
  %263 = vrot.lane.b32.xlu0 %v262, 64
  %v264 = vpop.permute.xlu0 %263
  %v265 = vadd.f32 %v262, %v264
  %266 = vrot.lane.b32.xlu0 %v265, 32
  %v267 = vpop.permute.xlu0 %266
  %v268 = vadd.f32 %v265, %v267
  %269 = vrot.lane.b32.xlu0 %v268, 16
  %v270 = vpop.permute.xlu0 %269
  %v271 = vadd.f32 %v268, %v270
  %272 = vrot.lane.b32.xlu0 %v271, 8
  %v273 = vpop.permute.xlu0 %272
  %v274 = vadd.f32 %v271, %v273
  %v275 = vmul.f32 %v241, %v241
  %v276 = vmul.f32 %v244, %v244
  %v277 = vmul.f32 %v247, %v247
  %v278 = vmul.f32 %v250, %v250
  %v279 = vadd.f32 %v275, %v276
  %v280 = vadd.f32 %v279, %v277
  %v281 = vadd.f32 %v280, %v278
  %v282 = vrot.slane %v281, 4
  %v283 = vadd.f32 %v281, %v282
  %v284 = vrot.slane %v283, 2
  %v285 = vadd.f32 %v283, %v284
  %v286 = vrot.slane %v285, 1
  %v287 = vadd.f32 %v285, %v286
  %288 = vrot.lane.b32.xlu0 %v287, 64
  %v289 = vpop.permute.xlu0 %288
  %v290 = vadd.f32 %v287, %v289
  %291 = vrot.lane.b32.xlu0 %v290, 32
  %v292 = vpop.permute.xlu0 %291
  %v293 = vadd.f32 %v290, %v292
  %294 = vrot.lane.b32.xlu0 %v293, 16
  %v295 = vpop.permute.xlu0 %294
  %v296 = vadd.f32 %v293, %v295
  %297 = vrot.lane.b32.xlu0 %v296, 8
  %v298 = vpop.permute.xlu0 %297
  %v299 = vadd.f32 %v296, %v298
  %v300 = vmul.f32 %v274, 0.001953125
  %v301 = vmul.f32 %v299, 0.001953125
  %v302 = vmul.f32 %v300, %v300
  %v303 = vsub.f32 %v301, %v302
  %v304 = vadd.f32 %v303, 1e-05
  %v305 = vrsqrt.pop %v304
  %v306 = vmul.f32 %v305, %v304
  %v307 = vmul.f32 %v306, %v305
  %v308 = vmul.f32 0.5, %v307
  %v309 = vsub.f32 1.5, %v308
  %v310 = vmul.f32 %v305, %v309
  %vm311 = vweird.f32 %v304
  %vm312 = vweird.f32 %v305
  %vm313 = vmor %vm311, %vm312
  %v314 = vsel %vm313, %v305, %v310
  %v315 = vmul.f32 %v252, %v314
  %v316 = vmul.f32 %v300, %v315
  %v317 = vsub.f32 %v253, %v316
  %v319 = vperm.slane %v315, 0
  %v321 = vmul.f32 %v241, %v319
  %v322 = vmul.f32 %v244, %v319
  %v323 = vmul.f32 %v247, %v319
  %v324 = vmul.f32 %v250, %v319
  %v326 = vperm.slane %v317, 0
  %v328 = vadd.f32 %v321, %v326
  %v329 = vadd.f32 %v322, %v326
  %v330 = vadd.f32 %v323, %v326
  %v331 = vadd.f32 %v324, %v326
  %v332 = vmax.f32 %v328, 0.0
  %v333 = vmax.f32 %v329, 0.0
  %v334 = vmax.f32 %v330, 0.0
  %v335 = vmax.f32 %v331, 0.0
  %v336 = vrot.slane %v332, 7
  %v337 = vrot.slane %v333, 7
  %v338 = vrot.slane %v334, 7
  %v339 = vrot.slane %v335, 7
  %v340 = vsel %vm95, %v338, %v339
  %v341 = vsel %vm95, %v337, %v338
  %v342 = vsel %vm95, %v336, %v337
  %v343 = vsel %vm95, %v339, %v336
  %v344 = vsel %vm79, 0.0, %v343
  %v345 = vsel %vm80, 0.0, %v342
  %v346 = vsel %vm81, 0.0, %v341
  %v347 = vsel %vm82, 0.0, %v340
  %v348 = vrot.slane %v332, 1
  %v349 = vrot.slane %v333, 1
  %v350 = vrot.slane %v334, 1
  %v351 = vrot.slane %v335, 1
  %v352 = vsel %vm108, %v350, %v351
  %v353 = vsel %vm108, %v349, %v350
  %v354 = vsel %vm108, %v348, %v349
  %v355 = vsel %vm108, %v351, %v348
  %v356 = vsel %vm83, 0.0, %v354
  %v357 = vsel %vm84, 0.0, %v353
  %v358 = vsel %vm85, 0.0, %v352
  %v359 = vsel %vm86, 0.0, %v355
  %v360 = vld [vmem:[%s4] sm:$0xff]
  %v361 = vld [vmem:[%s4 + $0x8] sm:$0xff]
  %v362 = vld [vmem:[%s4 + $0x10] sm:$0xff]
  %v363 = vld [vmem:[%s4 + $0x18] sm:$0xff]
  %v364 = vld [vmem:[%s4 + $0x20] sm:$0xff]
  %v365 = vld [vmem:[%s4 + $0x28] sm:$0xff]
  %v366 = vld [vmem:[%s4 + $0x30] sm:$0xff]
  %v367 = vld [vmem:[%s4 + $0x38] sm:$0xff]
  %v368 = vld [vmem:[%s4 + $0x40] sm:$0xff]
  %v369 = vld [vmem:[%s4 + $0x48] sm:$0xff]
  %v370 = vld [vmem:[%s4 + $0x50] sm:$0xff]
  %v371 = vld [vmem:[%s4 + $0x58] sm:$0xff]
  %v372 = vld [vmem:[%s4 + $0x60] sm:$0xff]
  %v373 = vld [vmem:[%s4 + $0x68] sm:$0xff]
  %v374 = vld [vmem:[%s4 + $0x70] sm:$0xff]
  %v375 = vld [vmem:[%s4 + $0x78] sm:$0xff]
  %v376 = vld [vmem:[%s4 + $0x80] sm:$0xff]
  %v377 = vld [vmem:[%s4 + $0x88] sm:$0xff]
  %v378 = vld [vmem:[%s4 + $0x90] sm:$0xff]
  %v379 = vld [vmem:[%s4 + $0x98] sm:$0xff]
  %v380 = vld [vmem:[%s4 + $0xa0] sm:$0xff]
  %v381 = vld [vmem:[%s4 + $0xa8] sm:$0xff]
  %v382 = vld [vmem:[%s4 + $0xb0] sm:$0xff]
  %v383 = vld [vmem:[%s4 + $0xb8] sm:$0xff]
  %v384 = vld [vmem:[%s4 + $0xc0] sm:$0xff]
  %v385 = vld [vmem:[%s4 + $0xc8] sm:$0xff]
  %v386 = vld [vmem:[%s4 + $0xd0] sm:$0xff]
  %v387 = vld [vmem:[%s4 + $0xd8] sm:$0xff]
  %v388 = vld [vmem:[%s4 + $0xe0] sm:$0xff]
  %v389 = vld [vmem:[%s4 + $0xe8] sm:$0xff]
  %v390 = vld [vmem:[%s4 + $0xf0] sm:$0xff]
  %v391 = vld [vmem:[%s4 + $0xf8] sm:$0xff]
  %v392 = vld [vmem:[%s4 + $0x100] sm:$0xff]
  %v393 = vld [vmem:[%s4 + $0x108] sm:$0xff]
  %v394 = vld [vmem:[%s4 + $0x110] sm:$0xff]
  %v395 = vld [vmem:[%s4 + $0x118] sm:$0xff]
  %v396 = vld [vmem:[%s4 + $0x120] sm:$0xff]
  %v397 = vld [vmem:[%s4 + $0x128] sm:$0xff]
  %v398 = vld [vmem:[%s4 + $0x130] sm:$0xff]
  %v399 = vld [vmem:[%s4 + $0x138] sm:$0xff]
  %v400 = vld [vmem:[%s4 + $0x140] sm:$0xff]
  %v401 = vld [vmem:[%s4 + $0x148] sm:$0xff]
  %v402 = vld [vmem:[%s4 + $0x150] sm:$0xff]
  %v403 = vld [vmem:[%s4 + $0x158] sm:$0xff]
  %v404 = vld [vmem:[%s4 + $0x160] sm:$0xff]
  %v405 = vld [vmem:[%s4 + $0x168] sm:$0xff]
  %v406 = vld [vmem:[%s4 + $0x170] sm:$0xff]
  %v407 = vld [vmem:[%s4 + $0x178] sm:$0xff]
  %408 = vmatpush.msra.mxu0 %v375
  %409 = vmatpush.msra.mxu0 %v374
  %410 = vmatpush.msra.mxu0 %v373
  %411 = vmatpush.msra.mxu0 %v372
  %412 = vmatpush.msra.mxu0 %v371
  %413 = vmatpush.msra.mxu0 %v370
  %414 = vmatpush.msra.mxu0 %v369
  %415 = vmatpush.msra.mxu0 %v368
  %416 = vmatpush.msra.mxu0 %v367
  %417 = vmatpush.msra.mxu0 %v366
  %418 = vmatpush.msra.mxu0 %v365
  %419 = vmatpush.msra.mxu0 %v364
  %420 = vmatpush.msra.mxu0 %v363
  %421 = vmatpush.msra.mxu0 %v362
  %422 = vmatpush.msra.mxu0 %v361
  %423 = vmatpush.msra.mxu0 %v360
  %424 = vmatmul.f32.gmra.mxu0 %v344
  %v425 = vpop.f32.mrf.mxu0
  %v426 = vadd.f32 0.0, %v425
  %427 = vmatmul.f32.gmra.mxu0 %v345
  %v428 = vpop.f32.mrf.mxu0
  %v429 = vadd.f32 0.0, %v428
  %430 = vmatmul.f32.gmra.mxu0 %v346
  %v431 = vpop.f32.mrf.mxu0
  %v432 = vadd.f32 0.0, %v431
  %433 = vmatmul.f32.gmra.mxu0 %v347
  %v434 = vpop.f32.mrf.mxu0
  %v435 = vadd.f32 0.0, %v434
  %436 = vdwg.mxu0
  %437 = vmatpush.msra.mxu0 %v391
  %438 = vmatpush.msra.mxu0 %v390
  %439 = vmatpush.msra.mxu0 %v389
  %440 = vmatpush.msra.mxu0 %v388
  %441 = vmatpush.msra.mxu0 %v387
  %442 = vmatpush.msra.mxu0 %v386
  %443 = vmatpush.msra.mxu0 %v385
  %444 = vmatpush.msra.mxu0 %v384
  %445 = vmatpush.msra.mxu0 %v383
  %446 = vmatpush.msra.mxu0 %v382
  %447 = vmatpush.msra.mxu0 %v381
  %448 = vmatpush.msra.mxu0 %v380
  %449 = vmatpush.msra.mxu0 %v379
  %450 = vmatpush.msra.mxu0 %v378
  %451 = vmatpush.msra.mxu0 %v377
  %452 = vmatpush.msra.mxu0 %v376
  %453 = vmatmul.f32.gmra.mxu0 %v332
  %v454 = vpop.f32.mrf.mxu0
  %v455 = vadd.f32 %v426, %v454
  %456 = vmatmul.f32.gmra.mxu0 %v333
  %v457 = vpop.f32.mrf.mxu0
  %v458 = vadd.f32 %v429, %v457
  %459 = vmatmul.f32.gmra.mxu0 %v334
  %v460 = vpop.f32.mrf.mxu0
  %v461 = vadd.f32 %v432, %v460
  %462 = vmatmul.f32.gmra.mxu0 %v335
  %v463 = vpop.f32.mrf.mxu0
  %v464 = vadd.f32 %v435, %v463
  %465 = vdwg.mxu0
  %466 = vmatpush.msra.mxu0 %v407
  %467 = vmatpush.msra.mxu0 %v406
  %468 = vmatpush.msra.mxu0 %v405
  %469 = vmatpush.msra.mxu0 %v404
  %470 = vmatpush.msra.mxu0 %v403
  %471 = vmatpush.msra.mxu0 %v402
  %472 = vmatpush.msra.mxu0 %v401
  %473 = vmatpush.msra.mxu0 %v400
  %474 = vmatpush.msra.mxu0 %v399
  %475 = vmatpush.msra.mxu0 %v398
  %476 = vmatpush.msra.mxu0 %v397
  %477 = vmatpush.msra.mxu0 %v396
  %478 = vmatpush.msra.mxu0 %v395
  %479 = vmatpush.msra.mxu0 %v394
  %480 = vmatpush.msra.mxu0 %v393
  %481 = vmatpush.msra.mxu0 %v392
  %482 = vmatmul.f32.gmra.mxu0 %v356
  %v483 = vpop.f32.mrf.mxu0
  %v484 = vadd.f32 %v455, %v483
  %485 = vmatmul.f32.gmra.mxu0 %v357
  %v486 = vpop.f32.mrf.mxu0
  %v487 = vadd.f32 %v458, %v486
  %488 = vmatmul.f32.gmra.mxu0 %v358
  %v489 = vpop.f32.mrf.mxu0
  %v490 = vadd.f32 %v461, %v489
  %491 = vmatmul.f32.gmra.mxu0 %v359
  %v492 = vpop.f32.mrf.mxu0
  %v493 = vadd.f32 %v464, %v492
  %494 = vdwg.mxu0
  %v495 = vld [vmem:[%s5] sm:$0x1]
  %v496 = vld [vmem:[%s6] sm:$0x1]
  %v497 = vadd.f32 %v484, %v487
  %v498 = vadd.f32 %v497, %v490
  %v499 = vadd.f32 %v498, %v493
  %v500 = vrot.slane %v499, 4
  %v501 = vadd.f32 %v499, %v500
  %v502 = vrot.slane %v501, 2
  %v503 = vadd.f32 %v501, %v502
  %v504 = vrot.slane %v503, 1
  %v505 = vadd.f32 %v503, %v504
  %506 = vrot.lane.b32.xlu0 %v505, 64
  %v507 = vpop.permute.xlu0 %506
  %v508 = vadd.f32 %v505, %v507
  %509 = vrot.lane.b32.xlu0 %v508, 32
  %v510 = vpop.permute.xlu0 %509
  %v511 = vadd.f32 %v508, %v510
  %512 = vrot.lane.b32.xlu0 %v511, 16
  %v513 = vpop.permute.xlu0 %512
  %v514 = vadd.f32 %v511, %v513
  %515 = vrot.lane.b32.xlu0 %v514, 8
  %v516 = vpop.permute.xlu0 %515
  %v517 = vadd.f32 %v514, %v516
  %v518 = vmul.f32 %v484, %v484
  %v519 = vmul.f32 %v487, %v487
  %v520 = vmul.f32 %v490, %v490
  %v521 = vmul.f32 %v493, %v493
  %v522 = vadd.f32 %v518, %v519
  %v523 = vadd.f32 %v522, %v520
  %v524 = vadd.f32 %v523, %v521
  %v525 = vrot.slane %v524, 4
  %v526 = vadd.f32 %v524, %v525
  %v527 = vrot.slane %v526, 2
  %v528 = vadd.f32 %v526, %v527
  %v529 = vrot.slane %v528, 1
  %v530 = vadd.f32 %v528, %v529
  %531 = vrot.lane.b32.xlu0 %v530, 64
  %v532 = vpop.permute.xlu0 %531
  %v533 = vadd.f32 %v530, %v532
  %534 = vrot.lane.b32.xlu0 %v533, 32
  %v535 = vpop.permute.xlu0 %534
  %v536 = vadd.f32 %v533, %v535
  %537 = vrot.lane.b32.xlu0 %v536, 16
  %v538 = vpop.permute.xlu0 %537
  %v539 = vadd.f32 %v536, %v538
  %540 = vrot.lane.b32.xlu0 %v539, 8
  %v541 = vpop.permute.xlu0 %540
  %v542 = vadd.f32 %v539, %v541
  %v543 = vmul.f32 %v517, 0.001953125
  %v544 = vmul.f32 %v542, 0.001953125
  %v545 = vmul.f32 %v543, %v543
  %v546 = vsub.f32 %v544, %v545
  %v547 = vadd.f32 %v546, 1e-05
  %v548 = vrsqrt.pop %v547
  %v549 = vmul.f32 %v548, %v547
  %v550 = vmul.f32 %v549, %v548
  %v551 = vmul.f32 0.5, %v550
  %v552 = vsub.f32 1.5, %v551
  %v553 = vmul.f32 %v548, %v552
  %vm554 = vweird.f32 %v547
  %vm555 = vweird.f32 %v548
  %vm556 = vmor %vm554, %vm555
  %v557 = vsel %vm556, %v548, %v553
  %v558 = vmul.f32 %v495, %v557
  %v559 = vmul.f32 %v543, %v558
  %v560 = vsub.f32 %v496, %v559
  %v562 = vperm.slane %v558, 0
  %v564 = vmul.f32 %v484, %v562
  %v565 = vmul.f32 %v487, %v562
  %v566 = vmul.f32 %v490, %v562
  %v567 = vmul.f32 %v493, %v562
  %v569 = vperm.slane %v560, 0
  %v571 = vadd.f32 %v564, %v569
  %v572 = vadd.f32 %v565, %v569
  %v573 = vadd.f32 %v566, %v569
  %v574 = vadd.f32 %v567, %v569
  %v575 = vadd.f32 %v87, %v571
  %v576 = vadd.f32 %v88, %v572
  %v577 = vadd.f32 %v89, %v573
  %v578 = vadd.f32 %v90, %v574
  %v579 = vmax.f32 %v575, 0.0
  %v580 = vmax.f32 %v576, 0.0
  %v581 = vmax.f32 %v577, 0.0
  %v582 = vmax.f32 %v578, 0.0
  %583 = vst [vmem:[%s7] sm:$0xff] %v579
  %584 = vst [vmem:[%s7 + $0x8] sm:$0xff] %v580
  %585 = vst [vmem:[%s7 + $0x10] sm:$0xff] %v581
  %586 = vst [vmem:[%s7 + $0x18] sm:$0xff] %v582
  // Predicated region
  $region30: #{residual_block.1} parent=0 // pred_check
    _
  $region31: #{residual_block.1} parent=0 // pred_check_branch
    %588 = sbr.rel (0) target = $region33
  $region32: #{residual_block.1} parent=0 // pred_region
    _
  $region33: #{residual_block.1} parent=0 // pred_fallthru
    _
  // Predicated region
  $region34: #{residual_block.1} parent=0 // pred_check
    _
  $region35: #{residual_block.1} parent=0 // pred_check_branch
    %590 = sbr.rel (0) target = $region37
  $region36: #{residual_block.1} parent=0 // pred_region
    _
  $region37: #{residual_block.1} parent=0 // pred_fallthru
    _

</llo_original>
